<compile_context>
chip_gen: v5e
topology: v5e:2x2
jax: 0.10.0
libtpu: 0.0.40
codegen_flags: <defaults>
</compile_context>

<pallas_src>
import functools

import jax
import jax.numpy as jnp
from jax import lax
from jax.experimental import pallas as pl
from jax.experimental.pallas import tpu as pltpu

TEMPERATURE = 0.07
BASE_TEMPERATURE = 0.07
C_THRESHOLD = 0.3
EPS = 1e-8


def _multi_supcon_kernel(anchor_ref, contrast_ref, base_ref, out_ref, *,
                         use_jaccard, n_views, row_tile, n_cols):
    """One anchor-row tile of the MultiSupCon loss.

    anchor_ref:   [TM, D]     bf16 anchor feature rows of this tile
    contrast_ref: [N,  D]     bf16 full contrast features (N = n_views*bsz)
    base_ref:     [TM, bsz]   f32 base mask / jaccard rows of this tile
    out_ref:      [1, 1, 128] f32 partial loss sum (lane-broadcast)
    """
    b = pl.program_id(0)
    row_start = b * row_tile

    a = anchor_ref[...]
    c = contrast_ref[...]

    # Similarity matmul on the MXU: contract the feature dim of both operands
    # directly (no f.T -> no XLU transpose / relayout of the [N, D] block).
    adc = lax.dot_general(
        a, c, (((1,), (1,)), ((), ())),
        preferred_element_type=jnp.float32,
    )
    # Temperature scaling kept post-matmul in f32 (faithful numerics); it is
    # free VPU filler under the EUP-bound exp/log epilogue.
    adc = adc * (1.0 / (TEMPERATURE + EPS))

    # Numerical-stability shift (torch detaches the max; forward identical).
    logits = adc - jnp.max(adc, axis=1, keepdims=True)

    # logits_mask: 1 everywhere except the self-contrast (diagonal) element.
    rows = lax.broadcasted_iota(jnp.int32, (row_tile, n_cols), 0) + row_start
    cols = lax.broadcasted_iota(jnp.int32, (row_tile, n_cols), 1)
    logits_mask = (rows != cols).astype(jnp.float32)

    # Replicate the base (bsz x bsz) rows across the n_views column copies
    # in-register instead of reading a tiled N x N array from HBM.
    base = base_ref[...]
    tiled = base if n_views == 1 else jnp.concatenate([base] * n_views, axis=1)

    if use_jaccard:
        mval = tiled                                      # jaccard weights
        mask = jnp.where(tiled >= C_THRESHOLD, 1.0, 0.0)  # positives (in-kernel)
    else:
        mval = None                                       # multi_val == 1
        mask = tiled
    mask = mask * logits_mask

    exp_logits = jnp.exp(logits) * logits_mask
    log_prob = logits - jnp.log(jnp.sum(exp_logits, axis=1, keepdims=True) + EPS)

    multi_log_prob = log_prob if mval is None else log_prob * mval
    num = jnp.sum(mask * multi_log_prob, axis=1, keepdims=True)   # (TM, 1)
    den = jnp.sum(mask, axis=1, keepdims=True) + EPS              # (TM, 1)
    loss_rows = -(TEMPERATURE / BASE_TEMPERATURE) * (num / den)   # (TM, 1)

    # Partial sum for this row tile; final mean (/N) happens in the wrapper.
    psum = jnp.sum(loss_rows, axis=0, keepdims=True)              # (1, 1)
    out_ref[...] = jnp.broadcast_to(psum[None], out_ref.shape)


def _jaccard_matrix(labels):
    # Vectorized equivalent of the per-pair calc_jacard_sim double loop.
    a = labels[:, None, :]
    b = labels[None, :, :]
    upper = jnp.sum(jnp.minimum(a, b), axis=-1).astype(jnp.float32)
    lower = jnp.sum(jnp.maximum(a, b), axis=-1).astype(jnp.float32)
    return upper / (lower + EPS)


def _pick_row_tile(bsz):
    # Largest multiple-of-8 divisor of bsz, capped at 128 (full-height MXU
    # tiles on v5e, bounded mask blocks everywhere).
    for tm in (128, 64, 32, 16, 8):
        if bsz % tm == 0:
            return tm
    return bsz  # odd/tiny bsz: one block per view (may need layout padding)


def multi_sup_con_loss(features, labels=None, mask=None, contrast_mode="all"):
    """features: [bsz, n_views, ...]; labels: [bsz, n_labels] multi-hot (optional)."""
    if features.ndim < 3:
        raise ValueError("`features` needs to be [bsz, n_views, ...]")
    if features.ndim > 3:
        features = features.reshape(features.shape[0], features.shape[1], -1)
    bsz, n_views, feat_dim = features.shape

    if labels is not None and mask is not None:
        raise ValueError("Cannot define both `labels` and `mask`")
    elif labels is None and mask is None:
        base = jnp.eye(bsz, dtype=jnp.float32)
        use_jaccard = False
    elif labels is not None:
        if labels.ndim < 2:
            raise ValueError("This loss only works with multi-label problem")
        base = _jaccard_matrix(labels)   # binary mask derived in-kernel
        use_jaccard = True
    else:
        base = mask.astype(jnp.float32)
        use_jaccard = False

    if contrast_mode == "all":
        anchor_count = n_views
    elif contrast_mode == "one":
        raise NotImplementedError  # TODO(synk): 'one' mode (anchor = view 0 only)
    else:
        raise ValueError(f"Unknown mode: {contrast_mode}")

    # contrast_feature = cat(unbind(features, dim=1), dim=0) -> [n_views*bsz, D]
    contrast_feature = jnp.transpose(features, (1, 0, 2)).reshape(
        n_views * bsz, feat_dim
    )
    # bf16 features feed the MXU at native rate; softmax math stays f32.
    cf = contrast_feature.astype(jnp.bfloat16)

    n_cols = n_views * bsz            # logits columns (= contrast rows)
    n_rows = anchor_count * bsz       # anchor rows (== n_cols in 'all' mode)
    row_tile = _pick_row_tile(bsz)
    nb = bsz // row_tile              # base row-blocks per view
    n_blocks = anchor_count * nb      # grid extent (row tiles)

    kernel = functools.partial(
        _multi_supcon_kernel,
        use_jaccard=use_jaccard,
        n_views=n_views,
        row_tile=row_tile,
        n_cols=n_cols,
    )

    out = pl.pallas_call(
        kernel,
        out_shape=jax.ShapeDtypeStruct((n_blocks, 1, 128), jnp.float32),
        grid_spec=pltpu.PrefetchScalarGridSpec(
            num_scalar_prefetch=0,
            grid=(n_blocks,),
            in_specs=[
                # anchor row tile (pipelined / double-buffered)
                pl.BlockSpec((row_tile, feat_dim), lambda b: (b, 0)),
                # full contrast features, resident across all steps
                pl.BlockSpec((n_cols, feat_dim), lambda b: (0, 0)),
                # base (bsz x bsz) mask/jaccard rows, replicated via index_map
                pl.BlockSpec((row_tile, bsz), lambda b: (b % nb, 0)),
            ],
            out_specs=pl.BlockSpec((1, 1, 128), lambda b: (b, 0, 0)),
        ),
        compiler_params=pltpu.CompilerParams(
            dimension_semantics=("parallel",),
        ),
    )(cf, cf, base)

    # Partial row sums -> mean over all anchor rows.
    return jnp.sum(out[:, 0, 0]) / n_rows


def _reference_loss(features, labels=None):
    # Pure-JAX reference mirroring the PyTorch forward ('all' mode).  Features
    # are rounded to bf16 (as fed to the MXU) so the comparison is tight.
    bsz, n_views, feat_dim = features.shape
    if labels is None:
        base_mask = jnp.eye(bsz, dtype=jnp.float32)
        base_mval = jnp.ones_like(base_mask)
    else:
        sim = _jaccard_matrix(labels)
        base_mask = jnp.where(sim >= C_THRESHOLD, 1.0, 0.0)
        base_mval = sim
    cf = jnp.transpose(features, (1, 0, 2)).reshape(n_views * bsz, feat_dim)
    cf = cf.astype(jnp.bfloat16).astype(jnp.float32)
    adc = jnp.dot(cf, cf.T, precision=lax.Precision.HIGHEST) / (TEMPERATURE + EPS)
    logits = adc - jnp.max(adc, axis=1, keepdims=True)
    n = n_views * bsz
    mask = jnp.tile(base_mask, (n_views, n_views))
    mval = jnp.tile(base_mval, (n_views, n_views))
    logits_mask = 1.0 - jnp.eye(n, dtype=jnp.float32)
    mask = mask * logits_mask
    exp_logits = jnp.exp(logits) * logits_mask
    log_prob = logits - jnp.log(exp_logits.sum(1, keepdims=True) + EPS)
    mean_pos = (mask * (log_prob * mval)).sum(1) / (mask.sum(1) + EPS)
    loss = -(TEMPERATURE / BASE_TEMPERATURE) * mean_pos
    return jnp.mean(loss)


if __name__ == "__main__":
    key = jax.random.PRNGKey(0)
    k1, k2 = jax.random.split(key)

    bsz, n_views, feat_dim, n_labels = 8, 2, 32, 5
    features = jax.random.normal(k1, (bsz, n_views, feat_dim), dtype=jnp.float32)
    # L2-normalize per view as is customary for SupCon features.
    features = features / jnp.linalg.norm(features, axis=-1, keepdims=True)
    labels = (jax.random.uniform(k2, (bsz, n_labels)) > 0.5).astype(jnp.float32)

    # Supervised (multi-label jaccard) path.
    loss = jax.block_until_ready(multi_sup_con_loss(features, labels=labels))
    ref = _reference_loss(features, labels=labels)
    assert jnp.allclose(loss, ref, rtol=1e-4, atol=1e-4), (loss, ref)

    # Unsupervised (SimCLR-style, eye mask) path.
    loss_u = jax.block_until_ready(multi_sup_con_loss(features))
    ref_u = _reference_loss(features, labels=None)
    assert jnp.allclose(loss_u, ref_u, rtol=1e-4, atol=1e-4), (loss_u, ref_u)

    print("KERNEL_OK")
</pallas_src>

<mosaic_0001>
module attributes {stable_mosaic.version = 11 : i64} {
  func.func @_multi_supcon_kernel(%arg0: i32, %arg1: memref<8x32xbf16, #tpu.memory_space<vmem>>, %arg2: memref<16x32xbf16, #tpu.memory_space<vmem>>, %arg3: memref<8x8xf32, #tpu.memory_space<vmem>>, %arg4: memref<1x1x128xf32, #tpu.memory_space<vmem>>) attributes {dimension_semantics = [#tpu.dimension_semantics<parallel>], iteration_bounds = array<i64: 2>, scalar_prefetch = 0 : i64, scratch_operands = 0 : i64, tpu.core_type = #tpu.core_type<tc>, window_params = [{transform_indices = @transform_0, window_bounds = array<i64: 8, 32>}, {pipeline_mode = #tpu.pipeline_mode<synchronous>, transform_indices = @transform_1, window_bounds = array<i64: 16, 32>}, {transform_indices = @transform_2, window_bounds = array<i64: 8, 8>}, {transform_indices = @transform_3, window_bounds = array<i64: 1, 1, 128>}]} {
    %c8_i32 = arith.constant 8 : i32
    %0 = arith.muli %arg0, %c8_i32 : i32
    %c0 = arith.constant 0 : index
    %c0_0 = arith.constant 0 : index
    %1 = vector.load %arg1[%c0, %c0_0] : memref<8x32xbf16, #tpu.memory_space<vmem>>, vector<8x32xbf16>
    %c0_1 = arith.constant 0 : index
    %c0_2 = arith.constant 0 : index
    %2 = vector.load %arg2[%c0_1, %c0_2] : memref<16x32xbf16, #tpu.memory_space<vmem>>, vector<16x32xbf16>
    %cst = arith.constant dense<0.000000e+00> : vector<8x16xf32>
    %3 = tpu.matmul %1, %2, %cst {dimension_numbers = #tpu.dot_dimension_numbers<[1], [1], [0], [0], [0, 0, 1, 0], [], []>} : vector<8x32xbf16>, vector<16x32xbf16>, vector<8x16xf32> -> vector<8x16xf32>
    %cst_3 = arith.constant 14.2857122 : f32
    %4 = vector.broadcast %cst_3 : f32 to vector<8x16xf32>
    %5 = arith.mulf %3, %4 : vector<8x16xf32>
    %cst_4 = arith.constant dense<0xFF800000> : vector<8xf32>
    %6 = vector.multi_reduction <maximumf>, %5, %cst_4 [1] : vector<8x16xf32> to vector<8xf32>
    %7 = vector.shape_cast %6 : vector<8xf32> to vector<8x1xf32>
    %8 = vector.broadcast %7 : vector<8x1xf32> to vector<8x16xf32>
    %9 = arith.subf %5, %8 : vector<8x16xf32>
    %10 = tpu.iota {dimensions = array<i32: 0>} : vector<8x16xi32>
    %11 = vector.broadcast %0 : i32 to vector<8x16xi32>
    %12 = arith.addi %10, %11 : vector<8x16xi32>
    %13 = tpu.iota {dimensions = array<i32: 1>} : vector<8x16xi32>
    %14 = arith.cmpi ne, %12, %13 : vector<8x16xi32>
    %15 = arith.extui %14 : vector<8x16xi1> to vector<8x16xi32>
    %16 = arith.sitofp %15 : vector<8x16xi32> to vector<8x16xf32>
    %c0_5 = arith.constant 0 : index
    %c0_6 = arith.constant 0 : index
    %17 = vector.load %arg3[%c0_5, %c0_6] : memref<8x8xf32, #tpu.memory_space<vmem>>, vector<8x8xf32>
    %18 = tpu.concatenate %17, %17 in 1 : vector<8x8xf32>, vector<8x8xf32> -> vector<8x16xf32>
    %cst_7 = arith.constant 3.000000e-01 : f32
    %19 = vector.broadcast %cst_7 : f32 to vector<8x16xf32>
    %20 = arith.cmpf oge, %18, %19 : vector<8x16xf32>
    %cst_8 = arith.constant 1.000000e+00 : f32
    %cst_9 = arith.constant 0.000000e+00 : f32
    %21 = vector.broadcast %cst_8 : f32 to vector<8x16xf32>
    %22 = vector.broadcast %cst_9 : f32 to vector<8x16xf32>
    %23 = arith.select %20, %21, %22 : vector<8x16xi1>, vector<8x16xf32>
    %24 = arith.mulf %23, %16 : vector<8x16xf32>
    %25 = math.exp %9 : vector<8x16xf32>
    %26 = arith.mulf %25, %16 : vector<8x16xf32>
    %cst_10 = arith.constant dense<0.000000e+00> : vector<8xf32>
    %27 = vector.multi_reduction <add>, %26, %cst_10 [1] : vector<8x16xf32> to vector<8xf32>
    %28 = vector.shape_cast %27 : vector<8xf32> to vector<8x1xf32>
    %cst_11 = arith.constant 9.99999993E-9 : f32
    %29 = vector.broadcast %cst_11 : f32 to vector<8x1xf32>
    %30 = arith.addf %28, %29 : vector<8x1xf32>
    %31 = math.log %30 : vector<8x1xf32>
    %32 = vector.broadcast %31 : vector<8x1xf32> to vector<8x16xf32>
    %33 = arith.subf %9, %32 : vector<8x16xf32>
    %34 = arith.mulf %33, %18 : vector<8x16xf32>
    %35 = arith.mulf %24, %34 : vector<8x16xf32>
    %cst_12 = arith.constant dense<0.000000e+00> : vector<8xf32>
    %36 = vector.multi_reduction <add>, %35, %cst_12 [1] : vector<8x16xf32> to vector<8xf32>
    %37 = vector.shape_cast %36 : vector<8xf32> to vector<8x1xf32>
    %cst_13 = arith.constant dense<0.000000e+00> : vector<8xf32>
    %38 = vector.multi_reduction <add>, %24, %cst_13 [1] : vector<8x16xf32> to vector<8xf32>
    %39 = vector.shape_cast %38 : vector<8xf32> to vector<8x1xf32>
    %cst_14 = arith.constant 9.99999993E-9 : f32
    %40 = vector.broadcast %cst_14 : f32 to vector<8x1xf32>
    %41 = arith.addf %39, %40 : vector<8x1xf32>
    %42 = arith.divf %37, %41 : vector<8x1xf32>
    %cst_15 = arith.constant -1.000000e+00 : f32
    %43 = vector.broadcast %cst_15 : f32 to vector<8x1xf32>
    %44 = arith.mulf %43, %42 : vector<8x1xf32>
    %cst_16 = arith.constant dense<0.000000e+00> : vector<1xf32>
    %45 = vector.multi_reduction <add>, %44, %cst_16 [0] : vector<8x1xf32> to vector<1xf32>
    %46 = vector.shape_cast %45 : vector<1xf32> to vector<1x1xf32>
    %47 = vector.shape_cast %46 : vector<1x1xf32> to vector<1x1x1xf32>
    %48 = vector.shape_cast %47 : vector<1x1x1xf32> to vector<1x1x1xf32>
    %49 = vector.broadcast %48 : vector<1x1x1xf32> to vector<1x1x128xf32>
    %c0_17 = arith.constant 0 : index
    %c0_18 = arith.constant 0 : index
    %c0_19 = arith.constant 0 : index
    %50 = vector.load %arg4[%c0_17, %c0_18, %c0_19] : memref<1x1x128xf32, #tpu.memory_space<vmem>>, vector<1x1x128xf32>
    tpu.vector_store %arg4[%c0_17, %c0_18, %c0_19], %49 {strides = array<i32>} : memref<1x1x128xf32, #tpu.memory_space<vmem>>, vector<1x1x128xf32>,
    return
  }
  func.func @transform_0(%arg0: i32) -> (i32, i32) {
    %c0_i32 = arith.constant 0 : i32
    %c0_i32_0 = arith.constant 0 : i32
    return %arg0, %c0_i32 : i32, i32
  }
  func.func @transform_1(%arg0: i32) -> (i32, i32) {
    %c0_i32 = arith.constant 0 : i32
    %c0_i32_0 = arith.constant 0 : i32
    %c0_i32_1 = arith.constant 0 : i32
    return %c0_i32, %c0_i32_0 : i32, i32
  }
  func.func @transform_2(%arg0: i32) -> (i32, i32) {
    %c1_i32 = arith.constant 1 : i32
    %c0_i32 = arith.constant 0 : i32
    %0 = arith.cmpi eq, %c1_i32, %c0_i32 : i32
    %c1_i32_0 = arith.constant 1 : i32
    %1 = arith.select %0, %c1_i32_0, %c1_i32 : i32
    %2 = arith.remsi %arg0, %1 : i32
    %c0_i32_1 = arith.constant 0 : i32
    %3 = arith.cmpi ne, %2, %c0_i32_1 : i32
    %c0_i32_2 = arith.constant 0 : i32
    %4 = arith.cmpi slt, %2, %c0_i32_2 : i32
    %c0_i32_3 = arith.constant 0 : i32
    %5 = arith.cmpi slt, %1, %c0_i32_3 : i32
    %6 = arith.xori %4, %5 : i1
    %7 = arith.andi %6, %3 : i1
    %8 = arith.addi %2, %1 : i32
    %9 = arith.select %7, %8, %2 : i32
    %c0_i32_4 = arith.constant 0 : i32
    %c0_i32_5 = arith.constant 0 : i32
    return %9, %c0_i32_4 : i32, i32
  }
  func.func @transform_3(%arg0: i32) -> (i32, i32, i32) {
    %c0_i32 = arith.constant 0 : i32
    %c0_i32_0 = arith.constant 0 : i32
    %c0_i32_1 = arith.constant 0 : i32
    return %arg0, %c0_i32, %c0_i32_0 : i32, i32, i32
  }
}

</mosaic_0001>

<llo_original>
// kernel: tpu_custom_call.1
$region0: #{tpu_custom_call.1}
  #allocation0 [shape = 'u32[]', space=smem, size = 0x4, offset = 0x4, fixed_abs, tag = 'smem constant byte address 0x4 - core index']
  #allocation1 [shape = 'u32[72,128]{1,0:T(1,128)}', space=vmem, size = 0x9000, scoped, tag = 'internal scratch']
  %s0 = inlined_call_operand.hbm [shape: bf16[16,32], index: 0, kind: input, shape index: {}]
  %s1 = inlined_call_operand.hbm [shape: bf16[16,32], index: 1, kind: input, shape index: {}]
  %s2 = inlined_call_operand.hbm [shape: f32[8,8], index: 2, kind: input, shape index: {}]
  %s3 = inlined_call_operand.hbm [shape: f32[2,1,128], index: 3, kind: output, shape index: {}]
  %s4 = sld [smem:[#allocation0]]
  $region57: #{tpu_custom_call.1} parent=0
    _
  %s6 = ssub.s32 1, %s4
  %s7 = scalar_select 0, %s6, %s4
  $region1: #{tpu_custom_call.1} parent=0
    #allocation2 [shape = 'u8[4096]{0}', space=vmem, size = 0x1000, scoped, tag = 'input window, operand 0']
    #allocation3 [shape = 's32[2]{0}', space=sflag, size = 0x8, scoped, tag = 'scoped memory for tpu_custom_call.1']
    #allocation4 [shape = 's32[2]{0}', space=sflag, size = 0x8, scoped, tag = 'scoped memory for tpu_custom_call.1']
    #allocation5 [shape = 'u8[4096]{0}', space=vmem, size = 0x1000, scoped, tag = 'input window, operand 1, single buffered']
    #allocation6 [shape = 's32[1]{0}', space=sflag, size = 0x4, scoped, tag = 'scoped memory for tpu_custom_call.1']
    #allocation7 [shape = 'u8[4096]{0}', space=vmem, size = 0x1000, scoped, tag = 'input window, operand 2, single buffered']
    #allocation8 [shape = 'u8[1024]{0}', space=vmem, size = 0x400, scoped, tag = 'output window, operand 0']
    %8 = vsyncpa [#allocation3], 0
    %s9 = scalar_lea.sflag [#allocation3], 1
    %10 = vsyncpa %s9, 0
    %11 = vsyncpa [#allocation6], 0
    %12 = vsyncpa [#allocation4], 0
    %s13 = scalar_lea.sflag [#allocation4], 1
    %14 = vsyncpa %s13, 0
    loop: start=0, step=1, limit=4
    $region2: #{tpu_custom_call.1} parent=1 // loop_pre_header
      _
    $region3: #{tpu_custom_call.1} parent=1 // loop_header
      %s16 = sphi 0, %s20
      %p17 = scmp.ge.s32.totalorder %s16, 4
      %s26 = sphi 0, %s28
      %s29 = sphi 0, %s26
      %s30 = sphi 0, %s29
      %s46 = sphi 0, %s30
      %s50 = sphi 0, %s50
      %s52 = sphi 0, %s50
      %s53 = sphi 0, %s52
      %s67 = sphi 0, %s53
      %s71 = sphi 0, %s71
      %s73 = sphi 0, %s71
      %s74 = sphi 0, %s73
      %s88 = sphi 0, %s74
      %s94 = sphi 0, %s96
      %s97 = sphi 0, %s94
      %s98 = sphi 0, %s97
      %s114 = sphi 0, %s98
    $region4: #{tpu_custom_call.1} parent=1 // loop_header_branch
      %19 = sbr.rel (%p17) target = $region8
    $region5: #{tpu_custom_call.1} parent=1 // loop_body
      %s21 = ssub.s32 %s16, 1
      %s22 = ssub.s32 %s16, 2
      %s23 = sadd.s32 %s16, 1
      %s24 = ssub.s32 %s16, %s23
      %p25 = scmp.eq.s32.totalorder %s24, 0
      %s27 = sadd.s32 %s26, 1
      %s28 = scalar_select %p25, %s26, %s27
      %p31 = pneg %p25
      %p32 = scmp.eq.s32.totalorder %s16, 1
      %p33 = por %p31, %p32
      %p34 = scmp.ne.s32.totalorder %s26, %s29
      %p35 = scmp.eq.s32.totalorder %s16, 0
      %p36 = por %p34, %p35
      %p37 = scmp.ne.s32.totalorder %s26, %s29
      %p38 = scmp.eq.s32.totalorder %s21, 1
      %p39 = por %p37, %p38
      %p40 = scmp.ne.s32.totalorder %s29, %s30
      %p41 = scmp.eq.s32.totalorder %s21, 0
      %p42 = por %p40, %p41
      %p43 = scmp.ne.s32.totalorder %s29, %s30
      %p44 = scmp.eq.s32.totalorder %s22, 1
      %p45 = por %p43, %p44
      %p47 = scmp.ne.s32.totalorder %s30, %s46
      %p48 = scmp.eq.s32.totalorder %s22, 0
      %p49 = por %p47, %p48
      %s51 = sadd.s32 %s50, 1
      %p54 = scmp.eq.s32.totalorder %s16, 1
      %p55 = scmp.ne.s32.totalorder %s50, %s52
      %p56 = scmp.eq.s32.totalorder %s16, 0
      %p57 = por %p55, %p56
      %p58 = scmp.ne.s32.totalorder %s50, %s52
      %p59 = scmp.eq.s32.totalorder %s21, 1
      %p60 = por %p58, %p59
      %p61 = scmp.ne.s32.totalorder %s52, %s53
      %p62 = scmp.eq.s32.totalorder %s21, 0
      %p63 = por %p61, %p62
      %p64 = scmp.ne.s32.totalorder %s52, %s53
      %p65 = scmp.eq.s32.totalorder %s22, 1
      %p66 = por %p64, %p65
      %p68 = scmp.ne.s32.totalorder %s53, %s67
      %p69 = scmp.eq.s32.totalorder %s22, 0
      %p70 = por %p68, %p69
      %s72 = sadd.s32 %s71, 1
      %p75 = scmp.eq.s32.totalorder %s16, 1
      %p76 = scmp.ne.s32.totalorder %s71, %s73
      %p77 = scmp.eq.s32.totalorder %s16, 0
      %p78 = por %p76, %p77
      %p79 = scmp.ne.s32.totalorder %s71, %s73
      %p80 = scmp.eq.s32.totalorder %s21, 1
      %p81 = por %p79, %p80
      %p82 = scmp.ne.s32.totalorder %s73, %s74
      %p83 = scmp.eq.s32.totalorder %s21, 0
      %p84 = por %p82, %p83
      %p85 = scmp.ne.s32.totalorder %s73, %s74
      %p86 = scmp.eq.s32.totalorder %s22, 1
      %p87 = por %p85, %p86
      %p89 = scmp.ne.s32.totalorder %s74, %s88
      %p90 = scmp.eq.s32.totalorder %s22, 0
      %p91 = por %p89, %p90
      %s92 = ssub.s32 %s16, %s23
      %p93 = scmp.eq.s32.totalorder %s92, 0
      %s95 = sadd.s32 %s94, 1
      %s96 = scalar_select %p93, %s94, %s95
      %p99 = pneg %p93
      %p100 = scmp.eq.s32.totalorder %s16, 1
      %p101 = por %p99, %p100
      %p102 = scmp.ne.s32.totalorder %s94, %s97
      %p103 = scmp.eq.s32.totalorder %s16, 0
      %p104 = por %p102, %p103
      %p105 = scmp.ne.s32.totalorder %s94, %s97
      %p106 = scmp.eq.s32.totalorder %s21, 1
      %p107 = por %p105, %p106
      %p108 = scmp.ne.s32.totalorder %s97, %s98
      %p109 = scmp.eq.s32.totalorder %s21, 0
      %p110 = por %p108, %p109
      %p111 = scmp.ne.s32.totalorder %s97, %s98
      %p112 = scmp.eq.s32.totalorder %s22, 1
      %p113 = por %p111, %p112
      %p115 = scmp.ne.s32.totalorder %s98, %s114
      %p116 = scmp.eq.s32.totalorder %s22, 0
      %p117 = por %p115, %p116
      %p118 = scmp.le.s32.totalorder 1, %s16
      %p119 = scmp.lt.s32.totalorder %s16, 3
      %p120 = pnand %p118, %p119
      %p121 = pneg %p120
      // Predicated region
      $region9: #{tpu_custom_call.1} parent=5 // pred_check
        _
      $region10: #{tpu_custom_call.1} parent=5 // pred_check_branch
        %123 = sbr.rel (%p120) target = $region12
      $region11: #{tpu_custom_call.1} parent=5 // pred_region
        %s124 = ssub.s32 %s16, 1
        // Predicated region
        $region13: #{tpu_custom_call.1} parent=11 // pred_check
          %p125 = pneg %p63
        $region14: #{tpu_custom_call.1} parent=11 // pred_check_branch
          %127 = sbr.rel (%p125) target = $region16
        $region15: #{tpu_custom_call.1} parent=11 // pred_region
          %129 = vsyncadd [#allocation6], 0
          %s130 = sshll.u32 %s1, 4
          %s131 = int_to_ptr.hbm [resolvable:$true] %s130
          %s132 = sshll.u32 [#allocation5], 4
          %s133 = int_to_ptr.vmem [resolvable:$true] %s132
          %138 = dma.hbm_to_vmem [thread:$0]  %s131, 128, %s133, [#allocation6], 64, 64, 4
        $region16: #{tpu_custom_call.1} parent=11 // pred_fallthru
          _
        // Predicated region
        $region17: #{tpu_custom_call.1} parent=11 // pred_check
          %p139 = pneg %p84
        $region18: #{tpu_custom_call.1} parent=11 // pred_check_branch
          %141 = sbr.rel (%p139) target = $region20
        $region19: #{tpu_custom_call.1} parent=11 // pred_region
          %143 = vsyncadd [#allocation6], 0
          %s145 = sshll.u32 %s2, 4
          %s146 = int_to_ptr.hbm [resolvable:$true] %s145
          %s147 = sshll.u32 [#allocation7], 4
          %s148 = int_to_ptr.vmem [resolvable:$true] %s147
          %150 = dma.hbm_to_vmem [thread:$0]  %s146, 128, %s148, [#allocation6]
        $region20: #{tpu_custom_call.1} parent=11 // pred_fallthru
          _
      $region12: #{tpu_custom_call.1} parent=5 // pred_fallthru
        _
      %p151 = scmp.lt.s32.totalorder %s16, 2
      // Predicated region
      $region21: #{tpu_custom_call.1} parent=5 // pred_check
        %p152 = pneg %p151
      $region22: #{tpu_custom_call.1} parent=5 // pred_check_branch
        %154 = sbr.rel (%p152) target = $region24
      $region23: #{tpu_custom_call.1} parent=5 // pred_region
        // Predicated region
        $region25: #{tpu_custom_call.1} parent=23 // pred_check
          %p155 = pneg %p36
        $region26: #{tpu_custom_call.1} parent=23 // pred_check_branch
          %157 = sbr.rel (%p155) target = $region28
        $region27: #{tpu_custom_call.1} parent=23 // pred_region
          %s158 = sand.u32 %s26, 1
          %s159 = scalar_lea.sflag [#allocation3], %s158
          %s160 = sand.u32 %s26, 1
          %s161 = smul.addr %s160, 4
          %s162 = scalar_lea.vmem [#allocation2], %s161
          %164 = vsyncadd %s159, 0
          %s165 = smul.addr %s16, 4
          %s166 = scalar_lea.hbm %s0, %s165
          %s168 = sshll.u32 %s166, 4
          %s169 = int_to_ptr.hbm [resolvable:$true] %s168
          %s170 = sshll.u32 %s162, 4
          %s171 = int_to_ptr.vmem [resolvable:$true] %s170
          %173 = dma.hbm_to_vmem [thread:$0]  %s169, 64, %s171, %s159
        $region28: #{tpu_custom_call.1} parent=23 // pred_fallthru
          _
      $region24: #{tpu_custom_call.1} parent=5 // pred_fallthru
        _
      %p174 = scmp.le.s32.totalorder 1, %s16
      %p175 = scmp.lt.s32.totalorder %s16, 3
      %p176 = pnand %p174, %p175
      %p177 = pneg %p176
      // Predicated region
      $region29: #{tpu_custom_call.1} parent=5 // pred_check
        _
      $region30: #{tpu_custom_call.1} parent=5 // pred_check_branch
        %179 = sbr.rel (%p176) target = $region32
      $region31: #{tpu_custom_call.1} parent=5 // pred_region
        %s180 = ssub.s32 %s16, 1
        %s181 = sand.u32 %s29, 1
        %s182 = scalar_lea.sflag [#allocation3], %s181
        %s183 = sand.u32 %s29, 1
        %s184 = smul.addr %s183, 4
        %s185 = scalar_lea.vmem [#allocation2], %s184
        // Predicated region
        $region33: #{tpu_custom_call.1} parent=31 // pred_check
          %p186 = pneg %p42
        $region34: #{tpu_custom_call.1} parent=31 // pred_check_branch
          %188 = sbr.rel (%p186) target = $region36
        $region35: #{tpu_custom_call.1} parent=31 // pred_region
          %190 = dma.done %s182, 64
        $region36: #{tpu_custom_call.1} parent=31 // pred_fallthru
          _
        // Predicated region
        $region37: #{tpu_custom_call.1} parent=31 // pred_check
          %p191 = pneg %p63
        $region38: #{tpu_custom_call.1} parent=31 // pred_check_branch
          %193 = sbr.rel (%p191) target = $region40
        $region39: #{tpu_custom_call.1} parent=31 // pred_region
          %195 = dma.done [#allocation6], 128
        $region40: #{tpu_custom_call.1} parent=31 // pred_fallthru
          _
        // Predicated region
        $region41: #{tpu_custom_call.1} parent=31 // pred_check
          %p196 = pneg %p84
        $region42: #{tpu_custom_call.1} parent=31 // pred_check_branch
          %198 = sbr.rel (%p196) target = $region44
        $region43: #{tpu_custom_call.1} parent=31 // pred_region
          %200 = dma.done [#allocation6], 128
        $region44: #{tpu_custom_call.1} parent=31 // pred_fallthru
          _
        %s201 = sand.u32 %s29, 1
        %s202 = scalar_lea.sflag [#allocation3], %s201
        %s203 = sand.u32 %s29, 1
        %s204 = smul.addr %s203, 4
        %s205 = scalar_lea.vmem [#allocation2], %s204
        %p206 = pneg %p42
        %p207 = pneg %p39
        %p208 = pneg %p63
        %p209 = pneg %p60
        %p210 = pneg %p84
        %p211 = pneg %p81
        %p212 = pneg %p110
        %p213 = pneg %p107
        %s214 = sand.u32 %s97, 1
        %s215 = scalar_lea.sflag [#allocation4], %s214
        %s216 = sand.u32 %s97, 1
        %s217 = scalar_lea.vmem [#allocation8], %s216
        %s219 = smul.u32 %s21, 8
        %v220 = vld [vmem:[%s185] sm:$0xf]
        %v221 = vld [vmem:[#allocation5] sm:$0xf]
        %v222 = vld [vmem:[#allocation5 + $0x4] sm:$0xf]
        %v225 = vunpack.c.l.b16 %v221
        %v226 = vunpack.c.l.b16 %v222
        %v227 = vpack.c.b16 %v226, %v225
        %vm228 = vcmask 261120
        %v230 = vsel %vm228, %v220, 0
        %v233 = vsel %vm228, %v227, 0
        %235 = vmatpush.bf16.xpose.msra.mxu0 0
        %236 = vmatpush.bf16.xpose.msra.mxu0 0
        %237 = vmatpush.bf16.xpose.msra.mxu0 0
        %238 = vmatpush.bf16.xpose.msra.mxu0 0
        %239 = vmatpush.bf16.xpose.msra.mxu0 0
        %240 = vmatpush.bf16.xpose.msra.mxu0 0
        %241 = vmatpush.bf16.xpose.msra.mxu0 0
        %242 = vmatpush.bf16.xpose.msra.mxu0 %v233
        %243 = vmatmul.bf16.gmra.mxu0 %v230
        %v244 = vpop.f32.mrf.mxu0
        %v245 = vadd.f32 0.0, %v244
        %v246 = vpop.f32.mrf.mxu0
        %247 = vdwg.mxu0
        %v248 = vmul.f32 %v245, 14.285712
        %vm249 = vcmask 130048
        %v250 = vsel %vm249, %v248, -inf
        %251 = vmax.xlane.f32.xlu0 %v250
        %v252 = vpop.xlane.xlu0 %251
        %v253 = vsub.f32 %v248, %v252
        %v254 = vlaneseq
        %v255 = vshrl.u32 %v254, 7
        %v256 = vstv %s219
        %v257 = vadd.s32 %v255, %v256
        %v258 = vlaneseq
        %v259 = vand.u32 %v258, 127
        %vm260 = vcmp.ne.s32.totalorder %v257, %v259
        %v261 = vsel %vm260, 1, 0
        %v262 = vcvt.s32.f32 %v261
        %v263 = vld [vmem:[#allocation7] sm:$0xff]
        %265 = vrot.lane.b32.xlu0 %v263, 8
        %v266 = vpop.permute.xlu0 %265
        %vm268 = vcmask 64512
        %v269 = vsel %vm268, %v263, %v266
        %vm270 = vcmp.ge.f32.partialorder %v269, 0.3
        %v271 = vsel %vm270, 1.0, 0.0
        %v272 = vmul.f32 %v271, %v262
        %v273 = vmul.f32 %v253, 1.442695
        %v274 = vpow.pop %v273
        %v275 = vmul.f32 %v274, %v262
        %v276 = vsel %vm249, %v275, 0.0
        %277 = vadd.xlane.f32.xlu0 %v276
        %v278 = vpop.xlane.xlu0 %277
        %v279 = vadd.f32 %v278, 1e-08
        %v280 = vlog2.pop %v279
        %v281 = vmul.f32 %v280, 0.6931472
        %v282 = vsub.f32 %v253, %v281
        %v283 = vmul.f32 %v282, %v269
        %v284 = vmul.f32 %v272, %v283
        %v285 = vsel %vm249, %v284, 0.0
        %286 = vadd.xlane.f32.xlu0 %v285
        %v287 = vpop.xlane.xlu0 %286
        %v288 = vsel %vm249, %v272, 0.0
        %289 = vadd.xlane.f32.xlu0 %v288
        %v290 = vpop.xlane.xlu0 %289
        %v291 = vadd.f32 %v290, 1e-08
        %v292 = vrcp.pop %v291
        %v293 = vmul.f32 %v291, %v292
        %v294 = vsub.f32 1.0, %v293
        %v295 = vmul.f32 %v292, %v294
        %v296 = vadd.f32 %v292, %v295
        %vm297 = vweird.f32 %v291
        %vm298 = vweird.f32 %v292
        %vm299 = vmor %vm297, %vm298
        %v300 = vsel %vm299, %v292, %v296
        %v301 = vand.u32 2147483647, %v291
        %vm302 = vcmp.eq.f32.partialorder %v301, 8.507059e+37
        %v303 = vand.u32 %v291, 2147483648
        %v304 = vor.u32 1.1754944e-38, %v303
        %v305 = vsel %vm302, %v304, %v300
        %v306 = vmul.f32 %v287, %v305
        %v307 = vmul.f32 %v306, -1.0
        %v308 = vrot.slane %v307, 4
        %v309 = vadd.f32 %v307, %v308
        %v310 = vrot.slane %v309, 2
        %v311 = vadd.f32 %v309, %v310
        %v312 = vrot.slane %v311, 1
        %v313 = vadd.f32 %v311, %v312
        %314 = vst [vmem:[%s217] sm:$0x1] %v313
        %s315 = sand.u32 %s97, 1
        %s316 = scalar_lea.sflag [#allocation4], %s315
        %s317 = sand.u32 %s97, 1
        %s318 = scalar_lea.vmem [#allocation8], %s317
        // Predicated region
        $region45: #{tpu_custom_call.1} parent=31 // pred_check
          %p319 = pneg %p107
        $region46: #{tpu_custom_call.1} parent=31 // pred_check_branch
          %321 = sbr.rel (%p319) target = $region48
        $region47: #{tpu_custom_call.1} parent=31 // pred_region
          %323 = vsyncadd %s316, 0
          %s324 = scalar_lea.hbm %s3, %s21
          %s326 = sshll.u32 %s318, 4
          %s327 = int_to_ptr.vmem [resolvable:$true] %s326
          %s328 = sshll.u32 %s324, 4
          %s329 = int_to_ptr.hbm [resolvable:$true] %s328
          %331 = dma.vmem_to_hbm [thread:$0]  %s327, 16, %s329, %s316
        $region48: #{tpu_custom_call.1} parent=31 // pred_fallthru
          _
      $region32: #{tpu_custom_call.1} parent=5 // pred_fallthru
        _
      %p332 = scmp.le.s32.totalorder 2, %s16
      // Predicated region
      $region49: #{tpu_custom_call.1} parent=5 // pred_check
        %p333 = pneg %p332
      $region50: #{tpu_custom_call.1} parent=5 // pred_check_branch
        %335 = sbr.rel (%p333) target = $region52
      $region51: #{tpu_custom_call.1} parent=5 // pred_region
        %s336 = ssub.s32 %s16, 2
        // Predicated region
        $region53: #{tpu_custom_call.1} parent=51 // pred_check
          %p337 = pneg %p113
        $region54: #{tpu_custom_call.1} parent=51 // pred_check_branch
          %339 = sbr.rel (%p337) target = $region56
        $region55: #{tpu_custom_call.1} parent=51 // pred_region
          %s340 = sand.u32 %s98, 1
          %s341 = scalar_lea.sflag [#allocation4], %s340
          %s342 = sand.u32 %s98, 1
          %s343 = scalar_lea.vmem [#allocation8], %s342
          %345 = dma.done %s341, 16
        $region56: #{tpu_custom_call.1} parent=51 // pred_fallthru
          _
      $region52: #{tpu_custom_call.1} parent=5 // pred_fallthru
        _
    $region6: #{tpu_custom_call.1} parent=1 // loop_footer
      %s20 = sadd.s32 1, %s16
    $region7: #{tpu_custom_call.1} parent=1 // loop_footer_branch
      %15 = sbr.rel target = $region3
    $region8: #{tpu_custom_call.1} parent=1 // loop_exit
      _
    %346 = vsyncpa [#allocation3], 1
    %s347 = scalar_lea.sflag [#allocation3], 1
    %348 = vsyncpa %s347, 1
    %349 = vsyncpa [#allocation6], 1
    %350 = vsyncpa [#allocation4], 1
    %s351 = scalar_lea.sflag [#allocation4], 1
    %352 = vsyncpa %s351, 1

</llo_original>
